<compile_context>
chip_gen: v7x
topology: tpu7x:2x2x1
jax: 0.10.0
libtpu: 0.0.40
codegen_flags: <defaults>
</compile_context>

<pallas_src>
import jax
import jax.numpy as jnp
from jax.experimental import pallas as pl
from jax.experimental.pallas import tpu as pltpu


def _round_up(x, m):
    return (x + m - 1) // m * m


def _choose_block_rows(rows, hwp, budget_bytes=1 << 20):
    """Row-chunk: multiple of 8, f32 working copy of one block <= budget."""
    bc = max(8, (budget_bytes // (hwp * 4)) // 8 * 8)
    return min(bc, _round_up(rows, 8))


def _make_tv_kernel(block_rows, hwp, w):
    groups = block_rows // 8

    def kernel(x_ref, mh_ref, mw_ref, acc_ref):
        @pl.when(pl.program_id(1) == 0)
        def _():
            acc_ref[...] = jnp.zeros_like(acc_ref)

        x = x_ref[...]                                    # (bc, HWp), native dtype
        # Forward-neighbour shifts via XLU lane rotations.  A positive rotate
        # by (HWp - k) is the same rotation as -k: rolled[j] = x[(j + k) % HWp].
        xh = pltpu.roll(x, hwp - w, axis=1)               # vertical neighbour (+W)
        xw = pltpu.roll(x, hwp - 1, axis=1)               # horizontal neighbour (+1)

        # Precomputed 0/1 masks zero out wrap-around, lane padding and the
        # last image row / last image column; f32 accumulation throughout.
        dh = (xh - x).astype(jnp.float32) * mh_ref[...]
        dw = (xw - x).astype(jnp.float32) * mw_ref[...]
        contrib = dh * dh + dw * dw                       # (bc, HWp) f32

        # Fold row-groups with pure VPU adds into the resident (8, HWp)
        # accumulator; no cross-lane reduction inside the grid loop.
        acc_ref[0] += contrib.reshape(groups, 8, hwp).sum(axis=0)

    return kernel


@jax.jit
def tv_loss(x):
    """Total-variation loss of x with shape (N, C, H, W); returns a scalar."""
    N, C, H, W = x.shape
    R, HW = N * C, H * W
    HWp = _round_up(HW, 128)                  # lane-dense last dim
    bc = _choose_block_rows(R, HWp)

    nb = pl.cdiv(R, bc)                       # number of row blocks
    P = 2 if nb >= 2 else 1                   # partitions for the parallel axis (v7x: 2 TCs)
    S = pl.cdiv(nb, P)                        # reduction steps per partition
    Rp = P * S * bc                           # padded row count

    x2 = x.reshape(R, HW)
    if HWp != HW or Rp != R:                  # zero rows / zero lanes contribute 0
        x2 = jnp.pad(x2, ((0, Rp - R), (0, HWp - HW)))

    col = jax.lax.iota(jnp.int32, HWp)
    mask_h = (col < HW - W).astype(jnp.float32).reshape(1, HWp)
    mask_w = ((col % W != W - 1) & (col < HW)).astype(jnp.float32).reshape(1, HWp)

    partials = pl.pallas_call(
        _make_tv_kernel(bc, HWp, W),
        out_shape=jax.ShapeDtypeStruct((P, 8, HWp), jnp.float32),
        grid=(P, S),
        in_specs=[
            pl.BlockSpec((bc, HWp), lambda p, s: (p * S + s, 0)),
            pl.BlockSpec((1, HWp), lambda p, s: (0, 0)),
            pl.BlockSpec((1, HWp), lambda p, s: (0, 0)),
        ],
        out_specs=pl.BlockSpec((1, 8, HWp), lambda p, s: (p, 0, 0)),
        compiler_params=pltpu.CompilerParams(
            dimension_semantics=("parallel", "arbitrary"),
            vmem_limit_bytes=32 * 1024 * 1024,
        ),
    )(x2, mask_h, mask_w)

    # Single small cross-lane reduction + normalization, outside the kernel.
    return jnp.sum(partials) / jnp.float32(N * C * H * W)


if __name__ == "__main__":
    key = jax.random.PRNGKey(0)
    N, C, H, W = 2, 4, 16, 16
    x = jax.random.normal(key, (N, C, H, W), dtype=jnp.float32)

    loss = jax.block_until_ready(tv_loss(x))

    # Pure-JAX reference (matches the PyTorch forward).
    h_tv = jnp.sum((x[:, :, 1:, :] - x[:, :, :-1, :]) ** 2)
    w_tv = jnp.sum((x[:, :, :, 1:] - x[:, :, :, :-1]) ** 2)
    ref = (h_tv + w_tv) / (N * C * H * W)

    assert loss.shape == ()
    assert jnp.allclose(loss, ref, atol=1e-5, rtol=1e-5), f"got {loss}, want {ref}"
    print("KERNEL_OK")
</pallas_src>

<mosaic_0001>
module attributes {stable_mosaic.version = 11 : i64} {
  func.func @kernel(%arg0: i32, %arg1: i32, %arg2: memref<8x256xf32, #tpu.memory_space<vmem>>, %arg3: memref<1x256xf32, #tpu.memory_space<vmem>>, %arg4: memref<1x256xf32, #tpu.memory_space<vmem>>, %arg5: memref<1x8x256xf32, #tpu.memory_space<vmem>>) attributes {dimension_semantics = [#tpu.dimension_semantics<parallel>, #tpu.dimension_semantics<arbitrary>], iteration_bounds = array<i64: 1, 1>, scalar_prefetch = 0 : i64, scratch_operands = 0 : i64, tpu.core_type = #tpu.core_type<tc>, window_params = [{transform_indices = @transform_0, window_bounds = array<i64: 8, 256>}, {pipeline_mode = #tpu.pipeline_mode<synchronous>, transform_indices = @transform_1, window_bounds = array<i64: 1, 256>}, {pipeline_mode = #tpu.pipeline_mode<synchronous>, transform_indices = @transform_2, window_bounds = array<i64: 1, 256>}, {transform_indices = @transform_3, window_bounds = array<i64: 1, 8, 256>}]} {
    %c0_i32 = arith.constant 0 : i32
    %0 = arith.cmpi eq, %arg1, %c0_i32 : i32
    %1 = arith.extui %0 : i1 to i32
    %c0_i32_0 = arith.constant 0 : i32
    %2 = arith.cmpi ne, %1, %c0_i32_0 : i32
    scf.if %2 {
      %cst_12 = arith.constant 0.000000e+00 : f32
      %25 = vector.broadcast %cst_12 : f32 to vector<1x8x256xf32>
      %c0_13 = arith.constant 0 : index
      %c0_14 = arith.constant 0 : index
      %c0_15 = arith.constant 0 : index
      %26 = vector.load %arg5[%c0_13, %c0_14, %c0_15] : memref<1x8x256xf32, #tpu.memory_space<vmem>>, vector<1x8x256xf32>
      tpu.vector_store %arg5[%c0_13, %c0_14, %c0_15], %25 {strides = array<i32>} : memref<1x8x256xf32, #tpu.memory_space<vmem>>, vector<1x8x256xf32>,
    } else {
    }
    %c0 = arith.constant 0 : index
    %c0_1 = arith.constant 0 : index
    %3 = vector.load %arg2[%c0, %c0_1] : memref<8x256xf32, #tpu.memory_space<vmem>>, vector<8x256xf32>
    %c240_i32 = arith.constant 240 : i32
    %4 = tpu.dynamic_rotate %3 by %c240_i32 dim 1 : vector<8x256xf32>, i32 -> vector<8x256xf32>
    %c255_i32 = arith.constant 255 : i32
    %5 = tpu.dynamic_rotate %3 by %c255_i32 dim 1 : vector<8x256xf32>, i32 -> vector<8x256xf32>
    %6 = arith.subf %4, %3 : vector<8x256xf32>
    %c0_2 = arith.constant 0 : index
    %c0_3 = arith.constant 0 : index
    %7 = vector.load %arg3[%c0_2, %c0_3] : memref<1x256xf32, #tpu.memory_space<vmem>>, vector<1x256xf32>
    %8 = vector.broadcast %7 : vector<1x256xf32> to vector<8x256xf32>
    %9 = arith.mulf %6, %8 : vector<8x256xf32>
    %10 = arith.subf %5, %3 : vector<8x256xf32>
    %c0_4 = arith.constant 0 : index
    %c0_5 = arith.constant 0 : index
    %11 = vector.load %arg4[%c0_4, %c0_5] : memref<1x256xf32, #tpu.memory_space<vmem>>, vector<1x256xf32>
    %12 = vector.broadcast %11 : vector<1x256xf32> to vector<8x256xf32>
    %13 = arith.mulf %10, %12 : vector<8x256xf32>
    %14 = arith.mulf %9, %9 : vector<8x256xf32>
    %15 = arith.mulf %13, %13 : vector<8x256xf32>
    %16 = arith.addf %14, %15 : vector<8x256xf32>
    %c0_6 = arith.constant 0 : index
    %c0_7 = arith.constant 0 : index
    %c0_8 = arith.constant 0 : index
    %17 = vector.load %arg5[%c0_6, %c0_7, %c0_8] : memref<1x8x256xf32, #tpu.memory_space<vmem>>, vector<1x8x256xf32>
    %18 = vector.shape_cast %17 : vector<1x8x256xf32> to vector<8x256xf32>
    %19 = vector.shape_cast %16 : vector<8x256xf32> to vector<1x8x256xf32>
    %cst = arith.constant dense<0.000000e+00> : vector<8x256xf32>
    %20 = vector.multi_reduction <add>, %19, %cst [0] : vector<1x8x256xf32> to vector<8x256xf32>
    %21 = arith.addf %18, %20 : vector<8x256xf32>
    %c0_9 = arith.constant 0 : index
    %c0_10 = arith.constant 0 : index
    %c0_11 = arith.constant 0 : index
    %22 = vector.load %arg5[%c0_9, %c0_10, %c0_11] : memref<1x8x256xf32, #tpu.memory_space<vmem>>, vector<1x8x256xf32>
    %23 = vector.shape_cast %22 : vector<1x8x256xf32> to vector<8x256xf32>
    %24 = vector.shape_cast %21 : vector<8x256xf32> to vector<1x8x256xf32>
    tpu.vector_store %arg5[%c0_9, %c0_10, %c0_11], %24 {strides = array<i32>} : memref<1x8x256xf32, #tpu.memory_space<vmem>>, vector<1x8x256xf32>,
    return
  }
  func.func @transform_0(%arg0: i32, %arg1: i32) -> (i32, i32) {
    %c1_i32 = arith.constant 1 : i32
    %0 = arith.muli %arg0, %c1_i32 : i32
    %1 = arith.addi %0, %arg1 : i32
    %c0_i32 = arith.constant 0 : i32
    %c0_i32_0 = arith.constant 0 : i32
    return %1, %c0_i32 : i32, i32
  }
  func.func @transform_1(%arg0: i32, %arg1: i32) -> (i32, i32) {
    %c0_i32 = arith.constant 0 : i32
    %c0_i32_0 = arith.constant 0 : i32
    %c0_i32_1 = arith.constant 0 : i32
    return %c0_i32, %c0_i32_0 : i32, i32
  }
  func.func @transform_2(%arg0: i32, %arg1: i32) -> (i32, i32) {
    %c0_i32 = arith.constant 0 : i32
    %c0_i32_0 = arith.constant 0 : i32
    %c0_i32_1 = arith.constant 0 : i32
    return %c0_i32, %c0_i32_0 : i32, i32
  }
  func.func @transform_3(%arg0: i32, %arg1: i32) -> (i32, i32, i32) {
    %c0_i32 = arith.constant 0 : i32
    %c0_i32_0 = arith.constant 0 : i32
    %c0_i32_1 = arith.constant 0 : i32
    return %arg0, %c0_i32, %c0_i32_0 : i32, i32, i32
  }
}

</mosaic_0001>

<llo_original>
// kernel: tv_loss.1
$region0: #{tv_loss.1}
  #allocation0 [shape = 'u32[]', space=smem, size = 0x4, offset = 0x4, fixed_abs, tag = 'smem constant byte address 0x4 - core index']
  #allocation1 [shape = 'u32[144,128]{1,0:T(1,128)}', space=vmem, size = 0x12000, scoped, tag = 'internal scratch']
  %s0 = inlined_call_operand.vmem [shape: f32[8,256], index: 0, kind: input, shape index: {}]
  %s1 = inlined_call_operand.vmem [shape: f32[1,256], index: 1, kind: input, shape index: {}]
  %s2 = inlined_call_operand.vmem [shape: f32[1,256], index: 2, kind: input, shape index: {}]
  %s3 = inlined_call_operand.vmem [shape: f32[1,8,256], index: 3, kind: output, shape index: {}]
  %s4 = sld [smem:[#allocation0]]
  $region26: #{tv_loss.1} parent=0
    _
  %s6 = ssub.s32 1, %s4
  %s7 = scalar_select 0, %s6, %s4
  // Predicated region
  $region2: #{tv_loss.1} parent=0 // pred_check
    _
  $region3: #{tv_loss.1} parent=0 // pred_check_branch
    %9 = sbr.rel (0) target = $region5
  $region4: #{tv_loss.1} parent=0 // pred_region
    %s10 = sadd.s32 0, 0
    %p11 = scmp.lt.s32.totalorder %s10, 0
    %s12 = scalar_select %p11, %s10, 0
    %s13 = smul.addr %s12, 2
    %s14 = smul.addr %s13, 8
    %s15 = scalar_lea.vmem %s0, %s14
    %s16 = sadd.s32 0, 0
  $region5: #{tv_loss.1} parent=0 // pred_fallthru
    _
  // Predicated region
  $region6: #{tv_loss.1} parent=0 // pred_check
    _
  $region7: #{tv_loss.1} parent=0 // pred_check_branch
    %18 = sbr.rel (0) target = $region9
  $region8: #{tv_loss.1} parent=0 // pred_region
    _
  $region9: #{tv_loss.1} parent=0 // pred_fallthru
    _
  // Predicated region
  $region10: #{tv_loss.1} parent=0 // pred_check
    _
  $region11: #{tv_loss.1} parent=0 // pred_check_branch
    %20 = sbr.rel (0) target = $region13
  $region12: #{tv_loss.1} parent=0 // pred_region
    _
  $region13: #{tv_loss.1} parent=0 // pred_fallthru
    _
  %s21 = sadd.s32 0, 0
  %p22 = scmp.lt.s32.totalorder %s21, 0
  %s23 = scalar_select %p22, %s21, 0
  %s24 = smul.addr %s23, 2
  %s25 = smul.addr %s24, 8
  %s26 = scalar_lea.vmem %s0, %s25
  %s27 = sadd.s32 0, 0
  %p28 = scmp.lt.s32.totalorder %s27, 0
  %s29 = scalar_select %p28, %s27, 0
  %s30 = smul.addr %s29, 2
  %s31 = smul.addr %s30, 8
  %s32 = scalar_lea.vmem %s0, %s31
  %s33 = sadd.s32 0, 0
  %p34 = scmp.eq.s32.totalorder 0, 0
  // Predicated region
  $region14: #{tv_loss.1} parent=0 // pred_check
    %p35 = pneg %p34
  $region15: #{tv_loss.1} parent=0 // pred_check_branch
    %37 = sbr.rel (%p35) target = $region17
  $region16: #{tv_loss.1} parent=0 // pred_region
    %38 = vst [vmem:[%s3] sm:$0xff] 0.0
    %39 = vst [vmem:[%s3 + $0x8] sm:$0xff] 0.0
  $region17: #{tv_loss.1} parent=0 // pred_fallthru
    _
  %v40 = vld [vmem:[%s32] sm:$0xff]
  %v41 = vld [vmem:[%s32 + $0x8] sm:$0xff]
  %42 = vrot.lane.b32.xlu0 %v40, 112
  %v43 = vpop.permute.xlu0 %42
  %44 = vrot.lane.b32.xlu0 %v41, 112
  %v45 = vpop.permute.xlu0 %44
  %v46 = vlaneseq
  %v47 = vand.u32 %v46, 127
  %vm48 = vcmp.lt.s32.totalorder %v47, 112
  %v49 = vsel %vm48, %v43, %v45
  %v50 = vsel %vm48, %v45, %v43
  %51 = vrot.lane.b32.xlu0 %v40, 127
  %v52 = vpop.permute.xlu0 %51
  %53 = vrot.lane.b32.xlu0 %v41, 127
  %v54 = vpop.permute.xlu0 %53
  %vm55 = vcmp.lt.s32.totalorder %v47, 127
  %v56 = vsel %vm55, %v52, %v54
  %v57 = vsel %vm55, %v54, %v52
  %v58 = vsub.f32 %v49, %v40
  %v59 = vsub.f32 %v50, %v41
  %v60 = vld [vmem:[%s1] sm:$0x3]
  %v62 = vlaneseq
  %v63 = vshrl.u32 %v62, 7
  %v64 = vsub.s32 0, %v63
  %v65 = vrot.slane %v60, %v64
  %v66 = vlaneseq
  %v67 = vshrl.u32 %v66, 7
  %v68 = vsub.s32 1, %v67
  %v69 = vrot.slane %v60, %v68
  %v72 = vmul.f32 %v58, %v65
  %v73 = vmul.f32 %v59, %v69
  %v74 = vsub.f32 %v56, %v40
  %v75 = vsub.f32 %v57, %v41
  %v76 = vld [vmem:[%s2] sm:$0x3]
  %v78 = vlaneseq
  %v79 = vshrl.u32 %v78, 7
  %v80 = vsub.s32 0, %v79
  %v81 = vrot.slane %v76, %v80
  %v82 = vlaneseq
  %v83 = vshrl.u32 %v82, 7
  %v84 = vsub.s32 1, %v83
  %v85 = vrot.slane %v76, %v84
  %v88 = vmul.f32 %v74, %v81
  %v89 = vmul.f32 %v75, %v85
  %v90 = vmul.f32 %v72, %v72
  %v91 = vmul.f32 %v73, %v73
  %v92 = vmul.f32 %v88, %v88
  %v93 = vmul.f32 %v89, %v89
  %v94 = vadd.f32 %v90, %v92
  %v95 = vadd.f32 %v91, %v93
  %v96 = vld [vmem:[%s3] sm:$0xff]
  %v97 = vld [vmem:[%s3 + $0x8] sm:$0xff]
  %v98 = vadd.f32 %v94, 0.0
  %v99 = vadd.f32 %v95, 0.0
  %v100 = vadd.f32 %v96, %v98
  %v101 = vadd.f32 %v97, %v99
  %102 = vst [vmem:[%s3] sm:$0xff] %v100
  %103 = vst [vmem:[%s3 + $0x8] sm:$0xff] %v101
  // Predicated region
  $region18: #{tv_loss.1} parent=0 // pred_check
    _
  $region19: #{tv_loss.1} parent=0 // pred_check_branch
    %105 = sbr.rel (0) target = $region21
  $region20: #{tv_loss.1} parent=0 // pred_region
    _
  $region21: #{tv_loss.1} parent=0 // pred_fallthru
    _
  // Predicated region
  $region22: #{tv_loss.1} parent=0 // pred_check
    _
  $region23: #{tv_loss.1} parent=0 // pred_check_branch
    %107 = sbr.rel (0) target = $region25
  $region24: #{tv_loss.1} parent=0 // pred_region
    _
  $region25: #{tv_loss.1} parent=0 // pred_fallthru
    _

</llo_original>
